<compile_context>
chip_gen: v7x
topology: tpu7x:2x2x1
jax: 0.10.0
libtpu: 0.0.40
codegen_flags: <defaults>
</compile_context>

<pallas_src>
import jax
import jax.numpy as jnp
from jax.experimental import pallas as pl
from jax.experimental.pallas import tpu as pltpu

LANE = 128       # TPU vreg lane width; last dim of every block
ROW_TILE = 256   # sublane rows per grid step: 256 x 128 f32 = 128 KiB per block


def _identity_kernel(x_ref, o_ref):
    # Pure copy: forward(x) == x.
    o_ref[...] = x_ref[...]


def eeg2video_forward(x):
    """Pallas implementation of eeg2video.forward(x) -> x."""
    orig_shape = x.shape
    orig_dtype = x.dtype

    # Flatten to a lane-dense 2-D slab (rows, 128), padding the tail so every
    # grid step sees a full (ROW_TILE, 128) aligned tile.
    flat = x.reshape(-1)
    n = flat.shape[0]
    block_elems = ROW_TILE * LANE
    pad = (-n) % block_elems
    if pad:
        flat = jnp.pad(flat, (0, pad))
    rows = flat.shape[0] // LANE
    x2 = flat.reshape(rows, LANE)

    y2 = pl.pallas_call(
        _identity_kernel,
        out_shape=jax.ShapeDtypeStruct((rows, LANE), orig_dtype),
        grid_spec=pltpu.PrefetchScalarGridSpec(
            num_scalar_prefetch=0,
            grid=(rows // ROW_TILE,),
            in_specs=[pl.BlockSpec((ROW_TILE, LANE), lambda i: (i, 0))],
            out_specs=pl.BlockSpec((ROW_TILE, LANE), lambda i: (i, 0)),
        ),
        compiler_params=pltpu.CompilerParams(
            dimension_semantics=("parallel",)),
    )(x2)

    # Strip padding and restore the original shape.  (Reshape/slice are glue
    # only; the module performs no computation.)
    return y2.reshape(-1)[:n].reshape(orig_shape)


if __name__ == "__main__":
    key = jax.random.PRNGKey(0)
    # Small EEG-like input: (batch=2, conv-channel=1, electrodes=4, time=200).
    x = jax.random.normal(key, (2, 1, 4, 200), dtype=jnp.float32)

    out = eeg2video_forward(x)
    out = jax.block_until_ready(out)

    assert out.shape == x.shape, (out.shape, x.shape)
    assert out.dtype == x.dtype, (out.dtype, x.dtype)
    # forward(x) == x exactly (identity module).
    assert bool(jnp.array_equal(out, x)), "identity kernel mismatch"

    print("KERNEL_OK")
</pallas_src>

<mosaic_0001>
module attributes {stable_mosaic.version = 11 : i64} {
  func.func @_identity_kernel(%arg0: i32, %arg1: memref<256x128xf32, #tpu.memory_space<vmem>>, %arg2: memref<256x128xf32, #tpu.memory_space<vmem>>) attributes {dimension_semantics = [#tpu.dimension_semantics<parallel>], iteration_bounds = array<i64: 1>, scalar_prefetch = 0 : i64, scratch_operands = 0 : i64, tpu.core_type = #tpu.core_type<tc>, window_params = [{transform_indices = @transform_0, window_bounds = array<i64: 256, 128>}, {transform_indices = @transform_1, window_bounds = array<i64: 256, 128>}]} {
    %c0 = arith.constant 0 : index
    %c0_0 = arith.constant 0 : index
    %0 = vector.load %arg1[%c0, %c0_0] : memref<256x128xf32, #tpu.memory_space<vmem>>, vector<256x128xf32>
    %c0_1 = arith.constant 0 : index
    %c0_2 = arith.constant 0 : index
    %1 = vector.load %arg2[%c0_1, %c0_2] : memref<256x128xf32, #tpu.memory_space<vmem>>, vector<256x128xf32>
    tpu.vector_store %arg2[%c0_1, %c0_2], %0 {strides = array<i32>} : memref<256x128xf32, #tpu.memory_space<vmem>>, vector<256x128xf32>,
    return
  }
  func.func @transform_0(%arg0: i32) -> (i32, i32) {
    %c0_i32 = arith.constant 0 : i32
    %c0_i32_0 = arith.constant 0 : i32
    return %arg0, %c0_i32 : i32, i32
  }
  func.func @transform_1(%arg0: i32) -> (i32, i32) {
    %c0_i32 = arith.constant 0 : i32
    %c0_i32_0 = arith.constant 0 : i32
    return %arg0, %c0_i32 : i32, i32
  }
}

</mosaic_0001>

<llo_original>
// kernel: tpu_custom_call.1
$region0: #{tpu_custom_call.1}
  #allocation0 [shape = 'u32[]', space=smem, size = 0x4, offset = 0x4, fixed_abs, tag = 'smem constant byte address 0x4 - core index']
  #allocation1 [shape = 'u32[144,128]{1,0:T(1,128)}', space=vmem, size = 0x12000, scoped, tag = 'internal scratch']
  %s0 = inlined_call_operand.hbm [shape: f32[256,128], index: 0, kind: input, shape index: {}]
  %s1 = inlined_call_operand.hbm [shape: f32[256,128], index: 1, kind: output, shape index: {}]
  %s2 = sld [smem:[#allocation0]]
  $region18: #{tpu_custom_call.1} parent=0
    _
  %s4 = ssub.s32 1, %s2
  %s5 = scalar_select 0, %s4, %s2
  $region1: #{tpu_custom_call.1} parent=0
    #allocation2 [shape = 'u8[131072]{0}', space=vmem, size = 0x20000, scoped, tag = 'input window, operand 0, single buffered']
    #allocation3 [shape = 's32[1]{0}', space=sflag, size = 0x4, scoped, tag = 'scoped memory for tpu_custom_call.1']
    #allocation4 [shape = 's32[1]{0}', space=sflag, size = 0x4, scoped, tag = 'scoped memory for tpu_custom_call.1']
    #allocation5 [shape = 'u8[131072]{0}', space=vmem, size = 0x20000, scoped, tag = 'output window, operand 0, single buffered']
    %6 = vsyncpa [#allocation3], 0
    %7 = vsyncpa [#allocation4], 0
    // Predicated region
    $region2: #{tpu_custom_call.1} parent=1 // pred_check
      _
    $region3: #{tpu_custom_call.1} parent=1 // pred_check_branch
      %9 = sbr.rel (0) target = $region5
    $region4: #{tpu_custom_call.1} parent=1 // pred_region
      %s11 = ssub.s32 4096, 4096
      %12 = vsyncadd [#allocation3], %s11
      %s13 = sshll.u32 [#allocation2], 4
      %s14 = int_to_ptr.vmem [resolvable:$true] %s13
      %19 = dma.hbm_to_vmem [thread:$0]  %s0, 4096, %s14, [#allocation3], 128, 128, 8
    $region5: #{tpu_custom_call.1} parent=1 // pred_fallthru
      _
    // Predicated region
    $region6: #{tpu_custom_call.1} parent=1 // pred_check
      _
    $region7: #{tpu_custom_call.1} parent=1 // pred_check_branch
      %21 = sbr.rel (0) target = $region9
    $region8: #{tpu_custom_call.1} parent=1 // pred_region
      %22 = dma.done [#allocation3], 4096
    $region9: #{tpu_custom_call.1} parent=1 // pred_fallthru
      _
    %v23 = vld [vmem:[#allocation2] sm:$0xff]
    %v24 = vld [vmem:[#allocation2 + $0x8] sm:$0xff]
    %v25 = vld [vmem:[#allocation2 + $0x10] sm:$0xff]
    %v26 = vld [vmem:[#allocation2 + $0x18] sm:$0xff]
    %v27 = vld [vmem:[#allocation2 + $0x20] sm:$0xff]
    %v28 = vld [vmem:[#allocation2 + $0x28] sm:$0xff]
    %v29 = vld [vmem:[#allocation2 + $0x30] sm:$0xff]
    %v30 = vld [vmem:[#allocation2 + $0x38] sm:$0xff]
    %v31 = vld [vmem:[#allocation2 + $0x40] sm:$0xff]
    %v32 = vld [vmem:[#allocation2 + $0x48] sm:$0xff]
    %v33 = vld [vmem:[#allocation2 + $0x50] sm:$0xff]
    %v34 = vld [vmem:[#allocation2 + $0x58] sm:$0xff]
    %v35 = vld [vmem:[#allocation2 + $0x60] sm:$0xff]
    %v36 = vld [vmem:[#allocation2 + $0x68] sm:$0xff]
    %v37 = vld [vmem:[#allocation2 + $0x70] sm:$0xff]
    %v38 = vld [vmem:[#allocation2 + $0x78] sm:$0xff]
    %v39 = vld [vmem:[#allocation2 + $0x80] sm:$0xff]
    %v40 = vld [vmem:[#allocation2 + $0x88] sm:$0xff]
    %v41 = vld [vmem:[#allocation2 + $0x90] sm:$0xff]
    %v42 = vld [vmem:[#allocation2 + $0x98] sm:$0xff]
    %v43 = vld [vmem:[#allocation2 + $0xa0] sm:$0xff]
    %v44 = vld [vmem:[#allocation2 + $0xa8] sm:$0xff]
    %v45 = vld [vmem:[#allocation2 + $0xb0] sm:$0xff]
    %v46 = vld [vmem:[#allocation2 + $0xb8] sm:$0xff]
    %v47 = vld [vmem:[#allocation2 + $0xc0] sm:$0xff]
    %v48 = vld [vmem:[#allocation2 + $0xc8] sm:$0xff]
    %v49 = vld [vmem:[#allocation2 + $0xd0] sm:$0xff]
    %v50 = vld [vmem:[#allocation2 + $0xd8] sm:$0xff]
    %v51 = vld [vmem:[#allocation2 + $0xe0] sm:$0xff]
    %v52 = vld [vmem:[#allocation2 + $0xe8] sm:$0xff]
    %v53 = vld [vmem:[#allocation2 + $0xf0] sm:$0xff]
    %v54 = vld [vmem:[#allocation2 + $0xf8] sm:$0xff]
    %55 = vst [vmem:[#allocation5] sm:$0xff] %v23
    %56 = vst [vmem:[#allocation5 + $0x8] sm:$0xff] %v24
    %57 = vst [vmem:[#allocation5 + $0x10] sm:$0xff] %v25
    %58 = vst [vmem:[#allocation5 + $0x18] sm:$0xff] %v26
    %59 = vst [vmem:[#allocation5 + $0x20] sm:$0xff] %v27
    %60 = vst [vmem:[#allocation5 + $0x28] sm:$0xff] %v28
    %61 = vst [vmem:[#allocation5 + $0x30] sm:$0xff] %v29
    %62 = vst [vmem:[#allocation5 + $0x38] sm:$0xff] %v30
    %63 = vst [vmem:[#allocation5 + $0x40] sm:$0xff] %v31
    %64 = vst [vmem:[#allocation5 + $0x48] sm:$0xff] %v32
    %65 = vst [vmem:[#allocation5 + $0x50] sm:$0xff] %v33
    %66 = vst [vmem:[#allocation5 + $0x58] sm:$0xff] %v34
    %67 = vst [vmem:[#allocation5 + $0x60] sm:$0xff] %v35
    %68 = vst [vmem:[#allocation5 + $0x68] sm:$0xff] %v36
    %69 = vst [vmem:[#allocation5 + $0x70] sm:$0xff] %v37
    %70 = vst [vmem:[#allocation5 + $0x78] sm:$0xff] %v38
    %71 = vst [vmem:[#allocation5 + $0x80] sm:$0xff] %v39
    %72 = vst [vmem:[#allocation5 + $0x88] sm:$0xff] %v40
    %73 = vst [vmem:[#allocation5 + $0x90] sm:$0xff] %v41
    %74 = vst [vmem:[#allocation5 + $0x98] sm:$0xff] %v42
    %75 = vst [vmem:[#allocation5 + $0xa0] sm:$0xff] %v43
    %76 = vst [vmem:[#allocation5 + $0xa8] sm:$0xff] %v44
    %77 = vst [vmem:[#allocation5 + $0xb0] sm:$0xff] %v45
    %78 = vst [vmem:[#allocation5 + $0xb8] sm:$0xff] %v46
    %79 = vst [vmem:[#allocation5 + $0xc0] sm:$0xff] %v47
    %80 = vst [vmem:[#allocation5 + $0xc8] sm:$0xff] %v48
    %81 = vst [vmem:[#allocation5 + $0xd0] sm:$0xff] %v49
    %82 = vst [vmem:[#allocation5 + $0xd8] sm:$0xff] %v50
    %83 = vst [vmem:[#allocation5 + $0xe0] sm:$0xff] %v51
    %84 = vst [vmem:[#allocation5 + $0xe8] sm:$0xff] %v52
    %85 = vst [vmem:[#allocation5 + $0xf0] sm:$0xff] %v53
    %86 = vst [vmem:[#allocation5 + $0xf8] sm:$0xff] %v54
    // Predicated region
    $region10: #{tpu_custom_call.1} parent=1 // pred_check
      _
    $region11: #{tpu_custom_call.1} parent=1 // pred_check_branch
      %88 = sbr.rel (0) target = $region13
    $region12: #{tpu_custom_call.1} parent=1 // pred_region
      %s90 = ssub.s32 4096, 4096
      %91 = vsyncadd [#allocation4], %s90
      %s92 = sshll.u32 [#allocation5], 4
      %s93 = int_to_ptr.vmem [resolvable:$true] %s92
      %98 = dma.vmem_to_hbm [thread:$0]  %s93, 4096, %s1, [#allocation4], 128, 128, 8
    $region13: #{tpu_custom_call.1} parent=1 // pred_fallthru
      _
    // Predicated region
    $region14: #{tpu_custom_call.1} parent=1 // pred_check
      _
    $region15: #{tpu_custom_call.1} parent=1 // pred_check_branch
      %100 = sbr.rel (0) target = $region17
    $region16: #{tpu_custom_call.1} parent=1 // pred_region
      %101 = dma.done [#allocation4], 4096
    $region17: #{tpu_custom_call.1} parent=1 // pred_fallthru
      _
    %102 = vsyncpa [#allocation3], 1
    %103 = vsyncpa [#allocation4], 1

</llo_original>
